<compile_context>
chip_gen: v6e
topology: v6e:2x2x1
jax: 0.10.0
libtpu: 0.0.40
codegen_flags: <defaults>
</compile_context>

<pallas_src>
import jax
import jax.numpy as jnp
from jax import lax
from jax.experimental import pallas as pl
from jax.experimental.pallas import tpu as pltpu

MNIST_CLASSES = 10


def _round_up(n, m):
    return ((n + m - 1) // m) * m


def shap_detector_kernel(x_ref,
                         w1_ref, b1_ref,
                         w2_ref, b2_ref,
                         w3_ref, b3_ref,
                         w4_ref, b4_ref,
                         o_ref):
    # In-kernel f32 -> bf16 cast: avoids a separate XLA pad/cast pass over x
    # (x is read from HBM exactly once, in its original dtype).
    x = x_ref[...].astype(w1_ref.dtype)

    # Layer 1: (tb, 80) @ (80, 256) on the MXU, f32 accumulate (MXU pads K=80).
    h = jnp.dot(x, w1_ref[...], preferred_element_type=jnp.float32)
    h = jnp.maximum(h + b1_ref[...], 0.0)

    # Layer 2: (tb, 256) @ (256, 128)
    h = jnp.dot(h.astype(w2_ref.dtype), w2_ref[...],
                preferred_element_type=jnp.float32)
    h = jnp.maximum(h + b2_ref[...], 0.0)

    # Layer 3: (tb, 128) @ (128, 16)
    h = jnp.dot(h.astype(w3_ref.dtype), w3_ref[...],
                preferred_element_type=jnp.float32)
    h = jnp.maximum(h + b3_ref[...], 0.0)            # (tb, 16) f32

    # Layer 4 (16 -> 1), produced lane-dense as a (1, tb) row:
    #   (1, 16) . (tb, 16)^T -> (1, tb)
    z = lax.dot_general(w4_ref[...], h,
                        dimension_numbers=(((1,), (1,)), ((), ())),
                        preferred_element_type=jnp.float32)
    z = z + b4_ref[...]                               # (1,1) broadcasts over (1, tb)

    # nn.Softmax() over the size-1 feature axis == exp(z - max)/sum == 1.0.
    # exp(z - z) reproduces that exactly (incl. NaN/Inf propagation) at 1 EUP op.
    o_ref[0] = jnp.exp(z - z)


def init_params(key, penultimate_size):
    """PyTorch-Linear-style U[-1/sqrt(fan_in), +1/sqrt(fan_in)] init.

    Weights are stored pre-transposed as (in, out); biases as (1, out); all f32.
    """
    dims = [penultimate_size * MNIST_CLASSES, 256, 128, 16, 1]
    params = []
    for i in range(4):
        fan_in, fan_out = dims[i], dims[i + 1]
        key, kw, kb = jax.random.split(key, 3)
        bound = 1.0 / jnp.sqrt(float(fan_in))
        w_t = jax.random.uniform(kw, (fan_in, fan_out), jnp.float32, -bound, bound)
        b = jax.random.uniform(kb, (1, fan_out), jnp.float32, -bound, bound)
        params.extend([w_t, b])
    return params


def prepare_params(params, compute_dtype=jnp.bfloat16):
    """One-time host-side layout prep: cast the three MXU weights to bf16 and
    lay out W4 as a (1, 16) row / b4 as (1, 1).  No K padding (MXU handles K=80)."""
    w1, b1, w2, b2, w3, b3, w4, b4 = params
    return [
        w1.astype(compute_dtype), b1.astype(jnp.float32),
        w2.astype(compute_dtype), b2.astype(jnp.float32),
        w3.astype(compute_dtype), b3.astype(jnp.float32),
        w4.reshape(1, -1).astype(jnp.float32),        # (16, 1) -> (1, 16)
        b4.reshape(1, 1).astype(jnp.float32),
    ]


def _choose_batch_tile(B, block_batch):
    """Pick the batch tile.

    Small batches get a single full-array tile (full-dim blocks are always
    legal, no padding/copy needed).  Large batches use big tiles, rounded to a
    multiple of 16 (bf16 sublane packing), but split into >= 2 tiles so v7x's
    two TensorCores both get work from the "parallel" batch grid.
    """
    two_tile_threshold = 2048
    if B <= block_batch and B < two_tile_threshold:
        return max(B, 1)
    tb = min(block_batch, _round_up(pl.cdiv(B, 2), 16))
    return max(tb, 16)


def shap_detector_forward(x, prepared_params, *, block_batch=4096):
    B, F = x.shape
    assert F == prepared_params[0].shape[0], "feature dim mismatch with W1"

    tb = _choose_batch_tile(B, block_batch)
    num_tiles = pl.cdiv(B, tb)

    in_specs = [pl.BlockSpec((tb, F), lambda i: (i, 0))]
    for p in prepared_params:
        # Constant block index -> weights/biases stay resident in VMEM
        # (Pallas skips the re-DMA when the block index does not change).
        in_specs.append(pl.BlockSpec(p.shape, lambda i: (0, 0)))

    # Advisory cost estimate so XLA schedules/overlaps the call sensibly.
    flops = 2 * B * (F * 256 + 256 * 128 + 128 * 16 + 16)
    bytes_accessed = int(
        x.size * x.dtype.itemsize
        + sum(int(p.size) * p.dtype.itemsize for p in prepared_params)
        + num_tiles * tb * 4)

    # Only raise the scoped-VMEM limit when the big-tile path actually needs it
    # (keeps small/test configurations on the conservative per-chip default).
    vmem_limit = (48 * 1024 * 1024) if tb >= 1024 else None

    out = pl.pallas_call(
        shap_detector_kernel,
        out_shape=jax.ShapeDtypeStruct((num_tiles, 1, tb), jnp.float32),
        grid=(num_tiles,),
        in_specs=in_specs,
        out_specs=pl.BlockSpec((1, 1, tb), lambda i: (i, 0, 0)),
        compiler_params=pltpu.CompilerParams(
            dimension_semantics=("parallel",),
            vmem_limit_bytes=vmem_limit),
        cost_estimate=pl.CostEstimate(
            flops=int(flops),
            transcendentals=int(num_tiles * tb),
            bytes_accessed=bytes_accessed),
    )(x, *prepared_params)

    # Lane-dense (num_tiles, 1, tb) rows -> (B, 1); any garbage rows from the
    # partial last input tile are sliced off here.
    return out.reshape(num_tiles * tb)[:B].reshape(B, 1)


if __name__ == "__main__":
    key = jax.random.PRNGKey(0)
    k_x, k_p = jax.random.split(key)

    penultimate_size = 8                              # classifier_penultimate_layer_size
    in_features = penultimate_size * MNIST_CLASSES    # 80

    params = init_params(k_p, penultimate_size)
    prepared = prepare_params(params)

    # Exercise (a) a multi-step grid with a partial final tile (37 rows @ tb=16)
    # and (b) a tiny single-tile batch using the default large block_batch.
    for batch, bb in ((37, 16), (4, 4096)):
        x = jax.random.normal(k_x, (batch, in_features), dtype=jnp.float32)
        out = shap_detector_forward(x, prepared, block_batch=bb)
        out = jax.block_until_ready(out)
        assert out.shape == (batch, 1)
        # softmax over a size-1 axis => identically 1.0 (PyTorch nn.Softmax() semantics)
        assert jnp.allclose(out, jnp.ones_like(out), atol=1e-6)

    print("KERNEL_OK")
</pallas_src>

<mosaic_0001>
module attributes {stable_mosaic.version = 11 : i64} {
  func.func @shap_detector_kernel(%arg0: i32, %arg1: memref<16x80xf32, #tpu.memory_space<vmem>>, %arg2: memref<80x256xbf16, #tpu.memory_space<vmem>>, %arg3: memref<1x256xf32, #tpu.memory_space<vmem>>, %arg4: memref<256x128xbf16, #tpu.memory_space<vmem>>, %arg5: memref<1x128xf32, #tpu.memory_space<vmem>>, %arg6: memref<128x16xbf16, #tpu.memory_space<vmem>>, %arg7: memref<1x16xf32, #tpu.memory_space<vmem>>, %arg8: memref<1x16xf32, #tpu.memory_space<vmem>>, %arg9: memref<1x1xf32, #tpu.memory_space<vmem>>, %arg10: memref<1x1x16xf32, #tpu.memory_space<vmem>>) attributes {dimension_semantics = [#tpu.dimension_semantics<parallel>], iteration_bounds = array<i64: 3>, scalar_prefetch = 0 : i64, scratch_operands = 0 : i64, tpu.core_type = #tpu.core_type<tc>, window_params = [{transform_indices = @transform_0, window_bounds = array<i64: 16, 80>}, {pipeline_mode = #tpu.pipeline_mode<synchronous>, transform_indices = @transform_1, window_bounds = array<i64: 80, 256>}, {pipeline_mode = #tpu.pipeline_mode<synchronous>, transform_indices = @transform_2, window_bounds = array<i64: 1, 256>}, {pipeline_mode = #tpu.pipeline_mode<synchronous>, transform_indices = @transform_3, window_bounds = array<i64: 256, 128>}, {pipeline_mode = #tpu.pipeline_mode<synchronous>, transform_indices = @transform_4, window_bounds = array<i64: 1, 128>}, {pipeline_mode = #tpu.pipeline_mode<synchronous>, transform_indices = @transform_5, window_bounds = array<i64: 128, 16>}, {pipeline_mode = #tpu.pipeline_mode<synchronous>, transform_indices = @transform_6, window_bounds = array<i64: 1, 16>}, {pipeline_mode = #tpu.pipeline_mode<synchronous>, transform_indices = @transform_7, window_bounds = array<i64: 1, 16>}, {pipeline_mode = #tpu.pipeline_mode<synchronous>, transform_indices = @transform_8, window_bounds = array<i64: 1, 1>}, {transform_indices = @transform_9, window_bounds = array<i64: 1, 1, 16>}]} {
    %c0 = arith.constant 0 : index
    %c0_0 = arith.constant 0 : index
    %0 = vector.load %arg1[%c0, %c0_0] : memref<16x80xf32, #tpu.memory_space<vmem>>, vector<16x80xf32>
    %1 = arith.truncf %0 : vector<16x80xf32> to vector<16x80xbf16>
    %c0_1 = arith.constant 0 : index
    %c0_2 = arith.constant 0 : index
    %2 = vector.load %arg2[%c0_1, %c0_2] : memref<80x256xbf16, #tpu.memory_space<vmem>>, vector<80x256xbf16>
    %cst = arith.constant dense<0.000000e+00> : vector<16x256xf32>
    %3 = tpu.matmul %1, %2, %cst {dimension_numbers = #tpu.dot_dimension_numbers<[1], [0], [0], [1], [0, 0, 1, 1], [], []>} : vector<16x80xbf16>, vector<80x256xbf16>, vector<16x256xf32> -> vector<16x256xf32>
    %c0_3 = arith.constant 0 : index
    %c0_4 = arith.constant 0 : index
    %4 = vector.load %arg3[%c0_3, %c0_4] : memref<1x256xf32, #tpu.memory_space<vmem>>, vector<1x256xf32>
    %5 = vector.broadcast %4 : vector<1x256xf32> to vector<16x256xf32>
    %6 = arith.addf %3, %5 : vector<16x256xf32>
    %cst_5 = arith.constant 0.000000e+00 : f32
    %7 = vector.broadcast %cst_5 : f32 to vector<16x256xf32>
    %8 = arith.maximumf %6, %7 : vector<16x256xf32>
    %9 = arith.truncf %8 : vector<16x256xf32> to vector<16x256xbf16>
    %c0_6 = arith.constant 0 : index
    %c0_7 = arith.constant 0 : index
    %10 = vector.load %arg4[%c0_6, %c0_7] : memref<256x128xbf16, #tpu.memory_space<vmem>>, vector<256x128xbf16>
    %cst_8 = arith.constant dense<0.000000e+00> : vector<16x128xf32>
    %11 = tpu.matmul %9, %10, %cst_8 {dimension_numbers = #tpu.dot_dimension_numbers<[1], [0], [0], [1], [0, 0, 1, 1], [], []>} : vector<16x256xbf16>, vector<256x128xbf16>, vector<16x128xf32> -> vector<16x128xf32>
    %c0_9 = arith.constant 0 : index
    %c0_10 = arith.constant 0 : index
    %12 = vector.load %arg5[%c0_9, %c0_10] : memref<1x128xf32, #tpu.memory_space<vmem>>, vector<1x128xf32>
    %13 = vector.broadcast %12 : vector<1x128xf32> to vector<16x128xf32>
    %14 = arith.addf %11, %13 : vector<16x128xf32>
    %cst_11 = arith.constant 0.000000e+00 : f32
    %15 = vector.broadcast %cst_11 : f32 to vector<16x128xf32>
    %16 = arith.maximumf %14, %15 : vector<16x128xf32>
    %17 = arith.truncf %16 : vector<16x128xf32> to vector<16x128xbf16>
    %c0_12 = arith.constant 0 : index
    %c0_13 = arith.constant 0 : index
    %18 = vector.load %arg6[%c0_12, %c0_13] : memref<128x16xbf16, #tpu.memory_space<vmem>>, vector<128x16xbf16>
    %cst_14 = arith.constant dense<0.000000e+00> : vector<16x16xf32>
    %19 = tpu.matmul %17, %18, %cst_14 {dimension_numbers = #tpu.dot_dimension_numbers<[1], [0], [0], [1], [0, 0, 1, 1], [], []>} : vector<16x128xbf16>, vector<128x16xbf16>, vector<16x16xf32> -> vector<16x16xf32>
    %c0_15 = arith.constant 0 : index
    %c0_16 = arith.constant 0 : index
    %20 = vector.load %arg7[%c0_15, %c0_16] : memref<1x16xf32, #tpu.memory_space<vmem>>, vector<1x16xf32>
    %21 = vector.broadcast %20 : vector<1x16xf32> to vector<16x16xf32>
    %22 = arith.addf %19, %21 : vector<16x16xf32>
    %cst_17 = arith.constant 0.000000e+00 : f32
    %23 = vector.broadcast %cst_17 : f32 to vector<16x16xf32>
    %24 = arith.maximumf %22, %23 : vector<16x16xf32>
    %c0_18 = arith.constant 0 : index
    %c0_19 = arith.constant 0 : index
    %25 = vector.load %arg8[%c0_18, %c0_19] : memref<1x16xf32, #tpu.memory_space<vmem>>, vector<1x16xf32>
    %cst_20 = arith.constant dense<0.000000e+00> : vector<1x16xf32>
    %26 = tpu.matmul %25, %24, %cst_20 {dimension_numbers = #tpu.dot_dimension_numbers<[1], [1], [0], [0], [0, 0, 1, 0], [], []>} : vector<1x16xf32>, vector<16x16xf32>, vector<1x16xf32> -> vector<1x16xf32>
    %c0_21 = arith.constant 0 : index
    %c0_22 = arith.constant 0 : index
    %27 = vector.load %arg9[%c0_21, %c0_22] : memref<1x1xf32, #tpu.memory_space<vmem>>, vector<1x1xf32>
    %28 = vector.broadcast %27 : vector<1x1xf32> to vector<1x16xf32>
    %29 = arith.addf %26, %28 : vector<1x16xf32>
    %30 = arith.subf %29, %29 : vector<1x16xf32>
    %31 = math.exp %30 : vector<1x16xf32>
    %c0_23 = arith.constant 0 : index
    %c0_24 = arith.constant 0 : index
    %c0_25 = arith.constant 0 : index
    %32 = vector.load %arg10[%c0_23, %c0_24, %c0_25] : memref<1x1x16xf32, #tpu.memory_space<vmem>>, vector<1x1x16xf32>
    %33 = vector.shape_cast %32 : vector<1x1x16xf32> to vector<1x16xf32>
    %34 = vector.shape_cast %31 : vector<1x16xf32> to vector<1x1x16xf32>
    tpu.vector_store %arg10[%c0_23, %c0_24, %c0_25], %34 {strides = array<i32>} : memref<1x1x16xf32, #tpu.memory_space<vmem>>, vector<1x1x16xf32>,
    return
  }
  func.func @transform_0(%arg0: i32) -> (i32, i32) {
    %c0_i32 = arith.constant 0 : i32
    %c0_i32_0 = arith.constant 0 : i32
    return %arg0, %c0_i32 : i32, i32
  }
  func.func @transform_1(%arg0: i32) -> (i32, i32) {
    %c0_i32 = arith.constant 0 : i32
    %c0_i32_0 = arith.constant 0 : i32
    %c0_i32_1 = arith.constant 0 : i32
    return %c0_i32, %c0_i32_0 : i32, i32
  }
  func.func @transform_2(%arg0: i32) -> (i32, i32) {
    %c0_i32 = arith.constant 0 : i32
    %c0_i32_0 = arith.constant 0 : i32
    %c0_i32_1 = arith.constant 0 : i32
    return %c0_i32, %c0_i32_0 : i32, i32
  }
  func.func @transform_3(%arg0: i32) -> (i32, i32) {
    %c0_i32 = arith.constant 0 : i32
    %c0_i32_0 = arith.constant 0 : i32
    %c0_i32_1 = arith.constant 0 : i32
    return %c0_i32, %c0_i32_0 : i32, i32
  }
  func.func @transform_4(%arg0: i32) -> (i32, i32) {
    %c0_i32 = arith.constant 0 : i32
    %c0_i32_0 = arith.constant 0 : i32
    %c0_i32_1 = arith.constant 0 : i32
    return %c0_i32, %c0_i32_0 : i32, i32
  }
  func.func @transform_5(%arg0: i32) -> (i32, i32) {
    %c0_i32 = arith.constant 0 : i32
    %c0_i32_0 = arith.constant 0 : i32
    %c0_i32_1 = arith.constant 0 : i32
    return %c0_i32, %c0_i32_0 : i32, i32
  }
  func.func @transform_6(%arg0: i32) -> (i32, i32) {
    %c0_i32 = arith.constant 0 : i32
    %c0_i32_0 = arith.constant 0 : i32
    %c0_i32_1 = arith.constant 0 : i32
    return %c0_i32, %c0_i32_0 : i32, i32
  }
  func.func @transform_7(%arg0: i32) -> (i32, i32) {
    %c0_i32 = arith.constant 0 : i32
    %c0_i32_0 = arith.constant 0 : i32
    %c0_i32_1 = arith.constant 0 : i32
    return %c0_i32, %c0_i32_0 : i32, i32
  }
  func.func @transform_8(%arg0: i32) -> (i32, i32) {
    %c0_i32 = arith.constant 0 : i32
    %c0_i32_0 = arith.constant 0 : i32
    %c0_i32_1 = arith.constant 0 : i32
    return %c0_i32, %c0_i32_0 : i32, i32
  }
  func.func @transform_9(%arg0: i32) -> (i32, i32, i32) {
    %c0_i32 = arith.constant 0 : i32
    %c0_i32_0 = arith.constant 0 : i32
    %c0_i32_1 = arith.constant 0 : i32
    return %arg0, %c0_i32, %c0_i32_0 : i32, i32, i32
  }
}

</mosaic_0001>

<llo_original>
// kernel: tpu_custom_call.1
$region0: #{tpu_custom_call.1}
  #allocation0 [shape = 'u32[]', space=smem, size = 0x4, offset = 0x4, fixed_abs, tag = 'smem constant byte address 0x4 - core index']
  #allocation1 [shape = 'u32[144,128]{1,0:T(1,128)}', space=vmem, size = 0x12000, scoped, tag = 'internal scratch']
  #allocation2 [shape = 'f32[1,1]{1,0:T(1,128)S(1)}', space=vmem, size = 0x200, scoped, tag = 'scoped memory for tpu_custom_call.1']
  %s0 = inlined_call_operand.vmem [shape: f32[37,80], index: 0, kind: input, shape index: {}]
  %s1 = inlined_call_operand.hbm [shape: bf16[80,256], index: 1, kind: input, shape index: {}]
  %s2 = inlined_call_operand.vmem [shape: f32[1,256], index: 2, kind: input, shape index: {}]
  %s3 = inlined_call_operand.hbm [shape: bf16[256,128], index: 3, kind: input, shape index: {}]
  %s4 = inlined_call_operand.vmem [shape: f32[1,128], index: 4, kind: input, shape index: {}]
  %s5 = inlined_call_operand.vmem [shape: bf16[128,16], index: 5, kind: input, shape index: {}]
  %s6 = inlined_call_operand.vmem [shape: f32[1,16], index: 6, kind: input, shape index: {}]
  %s7 = inlined_call_operand.vmem [shape: f32[1,16], index: 7, kind: input, shape index: {}]
  %s8 = inlined_call_operand.<no memory space> [shape: f32[1,1], index: 8, kind: input, shape index: {}]
  %s9 = inlined_call_operand.hbm [shape: f32[3,1,16], index: 9, kind: output, shape index: {}]
  %s10 = sld [smem:[#allocation0]]
  $region77: #{tpu_custom_call.1} parent=0
    _
  %s12 = ssub.s32 1, %s10
  %s13 = scalar_select 0, %s12, %s10
  %v14 = vstv %s8
  %15 = vst [vmem:[#allocation2] sm:$0x1] %v14
  $region1: #{tpu_custom_call.1} parent=0
    #allocation3 [shape = 'u8[40960]{0}', space=vmem, size = 0xa000, scoped, tag = 'input window, operand 1, single buffered']
    #allocation4 [shape = 's32[2]{0}', space=sflag, size = 0x8, scoped, tag = 'scoped memory for tpu_custom_call.1']
    #allocation5 [shape = 's32[2]{0}', space=sflag, size = 0x8, scoped, tag = 'scoped memory for tpu_custom_call.1']
    #allocation6 [shape = 'u8[65536]{0}', space=vmem, size = 0x10000, scoped, tag = 'input window, operand 3, single buffered']
    #allocation7 [shape = 's32[1]{0}', space=sflag, size = 0x4, scoped, tag = 'scoped memory for tpu_custom_call.1']
    #allocation8 [shape = 'u8[1024]{0}', space=vmem, size = 0x400, scoped, tag = 'output window, operand 0']
    %16 = vsyncpa [#allocation4], 0
    %17 = vsyncpa [#allocation7], 0
    %18 = vsyncpa [#allocation5], 0
    %s19 = scalar_lea.sflag [#allocation5], 1
    %20 = vsyncpa %s19, 0
    loop: start=0, step=1, limit=5
    $region2: #{tpu_custom_call.1} parent=1 // loop_pre_header
      _
    $region3: #{tpu_custom_call.1} parent=1 // loop_header
      %s22 = sphi 0, %s26
      %p23 = scmp.ge.s32.totalorder %s22, 5
      %s32 = sphi 0, %s34
      %s35 = sphi 0, %s32
      %s36 = sphi 0, %s35
      %s52 = sphi 0, %s36
      %s56 = sphi 0, %s56
      %s58 = sphi 0, %s56
      %s59 = sphi 0, %s58
      %s73 = sphi 0, %s59
      %s77 = sphi 0, %s77
      %s79 = sphi 0, %s77
      %s80 = sphi 0, %s79
      %s94 = sphi 0, %s80
      %s98 = sphi 0, %s98
      %s100 = sphi 0, %s98
      %s101 = sphi 0, %s100
      %s115 = sphi 0, %s101
      %s119 = sphi 0, %s119
      %s121 = sphi 0, %s119
      %s122 = sphi 0, %s121
      %s136 = sphi 0, %s122
      %s140 = sphi 0, %s140
      %s142 = sphi 0, %s140
      %s143 = sphi 0, %s142
      %s157 = sphi 0, %s143
      %s161 = sphi 0, %s161
      %s163 = sphi 0, %s161
      %s164 = sphi 0, %s163
      %s178 = sphi 0, %s164
      %s182 = sphi 0, %s182
      %s184 = sphi 0, %s182
      %s185 = sphi 0, %s184
      %s199 = sphi 0, %s185
      %s203 = sphi 0, %s203
      %s205 = sphi 0, %s203
      %s206 = sphi 0, %s205
      %s220 = sphi 0, %s206
      %s226 = sphi 0, %s228
      %s229 = sphi 0, %s226
      %s230 = sphi 0, %s229
      %s246 = sphi 0, %s230
    $region4: #{tpu_custom_call.1} parent=1 // loop_header_branch
      %25 = sbr.rel (%p23) target = $region8
    $region5: #{tpu_custom_call.1} parent=1 // loop_body
      %s27 = ssub.s32 %s22, 1
      %s28 = ssub.s32 %s22, 2
      %s29 = sadd.s32 %s22, 1
      %s30 = ssub.s32 %s22, %s29
      %p31 = scmp.eq.s32.totalorder %s30, 0
      %s33 = sadd.s32 %s32, 1
      %s34 = scalar_select %p31, %s32, %s33
      %p37 = pneg %p31
      %p38 = scmp.eq.s32.totalorder %s22, 2
      %p39 = por %p37, %p38
      %p40 = scmp.ne.s32.totalorder %s32, %s35
      %p41 = scmp.eq.s32.totalorder %s22, 0
      %p42 = por %p40, %p41
      %p43 = scmp.ne.s32.totalorder %s32, %s35
      %p44 = scmp.eq.s32.totalorder %s27, 2
      %p45 = por %p43, %p44
      %p46 = scmp.ne.s32.totalorder %s35, %s36
      %p47 = scmp.eq.s32.totalorder %s27, 0
      %p48 = por %p46, %p47
      %p49 = scmp.ne.s32.totalorder %s35, %s36
      %p50 = scmp.eq.s32.totalorder %s28, 2
      %p51 = por %p49, %p50
      %p53 = scmp.ne.s32.totalorder %s36, %s52
      %p54 = scmp.eq.s32.totalorder %s28, 0
      %p55 = por %p53, %p54
      %s57 = sadd.s32 %s56, 1
      %p60 = scmp.eq.s32.totalorder %s22, 2
      %p61 = scmp.ne.s32.totalorder %s56, %s58
      %p62 = scmp.eq.s32.totalorder %s22, 0
      %p63 = por %p61, %p62
      %p64 = scmp.ne.s32.totalorder %s56, %s58
      %p65 = scmp.eq.s32.totalorder %s27, 2
      %p66 = por %p64, %p65
      %p67 = scmp.ne.s32.totalorder %s58, %s59
      %p68 = scmp.eq.s32.totalorder %s27, 0
      %p69 = por %p67, %p68
      %p70 = scmp.ne.s32.totalorder %s58, %s59
      %p71 = scmp.eq.s32.totalorder %s28, 2
      %p72 = por %p70, %p71
      %p74 = scmp.ne.s32.totalorder %s59, %s73
      %p75 = scmp.eq.s32.totalorder %s28, 0
      %p76 = por %p74, %p75
      %s78 = sadd.s32 %s77, 1
      %p81 = scmp.eq.s32.totalorder %s22, 2
      %p82 = scmp.ne.s32.totalorder %s77, %s79
      %p83 = scmp.eq.s32.totalorder %s22, 0
      %p84 = por %p82, %p83
      %p85 = scmp.ne.s32.totalorder %s77, %s79
      %p86 = scmp.eq.s32.totalorder %s27, 2
      %p87 = por %p85, %p86
      %p88 = scmp.ne.s32.totalorder %s79, %s80
      %p89 = scmp.eq.s32.totalorder %s27, 0
      %p90 = por %p88, %p89
      %p91 = scmp.ne.s32.totalorder %s79, %s80
      %p92 = scmp.eq.s32.totalorder %s28, 2
      %p93 = por %p91, %p92
      %p95 = scmp.ne.s32.totalorder %s80, %s94
      %p96 = scmp.eq.s32.totalorder %s28, 0
      %p97 = por %p95, %p96
      %s99 = sadd.s32 %s98, 1
      %p102 = scmp.eq.s32.totalorder %s22, 2
      %p103 = scmp.ne.s32.totalorder %s98, %s100
      %p104 = scmp.eq.s32.totalorder %s22, 0
      %p105 = por %p103, %p104
      %p106 = scmp.ne.s32.totalorder %s98, %s100
      %p107 = scmp.eq.s32.totalorder %s27, 2
      %p108 = por %p106, %p107
      %p109 = scmp.ne.s32.totalorder %s100, %s101
      %p110 = scmp.eq.s32.totalorder %s27, 0
      %p111 = por %p109, %p110
      %p112 = scmp.ne.s32.totalorder %s100, %s101
      %p113 = scmp.eq.s32.totalorder %s28, 2
      %p114 = por %p112, %p113
      %p116 = scmp.ne.s32.totalorder %s101, %s115
      %p117 = scmp.eq.s32.totalorder %s28, 0
      %p118 = por %p116, %p117
      %s120 = sadd.s32 %s119, 1
      %p123 = scmp.eq.s32.totalorder %s22, 2
      %p124 = scmp.ne.s32.totalorder %s119, %s121
      %p125 = scmp.eq.s32.totalorder %s22, 0
      %p126 = por %p124, %p125
      %p127 = scmp.ne.s32.totalorder %s119, %s121
      %p128 = scmp.eq.s32.totalorder %s27, 2
      %p129 = por %p127, %p128
      %p130 = scmp.ne.s32.totalorder %s121, %s122
      %p131 = scmp.eq.s32.totalorder %s27, 0
      %p132 = por %p130, %p131
      %p133 = scmp.ne.s32.totalorder %s121, %s122
      %p134 = scmp.eq.s32.totalorder %s28, 2
      %p135 = por %p133, %p134
      %p137 = scmp.ne.s32.totalorder %s122, %s136
      %p138 = scmp.eq.s32.totalorder %s28, 0
      %p139 = por %p137, %p138
      %s141 = sadd.s32 %s140, 1
      %p144 = scmp.eq.s32.totalorder %s22, 2
      %p145 = scmp.ne.s32.totalorder %s140, %s142
      %p146 = scmp.eq.s32.totalorder %s22, 0
      %p147 = por %p145, %p146
      %p148 = scmp.ne.s32.totalorder %s140, %s142
      %p149 = scmp.eq.s32.totalorder %s27, 2
      %p150 = por %p148, %p149
      %p151 = scmp.ne.s32.totalorder %s142, %s143
      %p152 = scmp.eq.s32.totalorder %s27, 0
      %p153 = por %p151, %p152
      %p154 = scmp.ne.s32.totalorder %s142, %s143
      %p155 = scmp.eq.s32.totalorder %s28, 2
      %p156 = por %p154, %p155
      %p158 = scmp.ne.s32.totalorder %s143, %s157
      %p159 = scmp.eq.s32.totalorder %s28, 0
      %p160 = por %p158, %p159
      %s162 = sadd.s32 %s161, 1
      %p165 = scmp.eq.s32.totalorder %s22, 2
      %p166 = scmp.ne.s32.totalorder %s161, %s163
      %p167 = scmp.eq.s32.totalorder %s22, 0
      %p168 = por %p166, %p167
      %p169 = scmp.ne.s32.totalorder %s161, %s163
      %p170 = scmp.eq.s32.totalorder %s27, 2
      %p171 = por %p169, %p170
      %p172 = scmp.ne.s32.totalorder %s163, %s164
      %p173 = scmp.eq.s32.totalorder %s27, 0
      %p174 = por %p172, %p173
      %p175 = scmp.ne.s32.totalorder %s163, %s164
      %p176 = scmp.eq.s32.totalorder %s28, 2
      %p177 = por %p175, %p176
      %p179 = scmp.ne.s32.totalorder %s164, %s178
      %p180 = scmp.eq.s32.totalorder %s28, 0
      %p181 = por %p179, %p180
      %s183 = sadd.s32 %s182, 1
      %p186 = scmp.eq.s32.totalorder %s22, 2
      %p187 = scmp.ne.s32.totalorder %s182, %s184
      %p188 = scmp.eq.s32.totalorder %s22, 0
      %p189 = por %p187, %p188
      %p190 = scmp.ne.s32.totalorder %s182, %s184
      %p191 = scmp.eq.s32.totalorder %s27, 2
      %p192 = por %p190, %p191
      %p193 = scmp.ne.s32.totalorder %s184, %s185
      %p194 = scmp.eq.s32.totalorder %s27, 0
      %p195 = por %p193, %p194
      %p196 = scmp.ne.s32.totalorder %s184, %s185
      %p197 = scmp.eq.s32.totalorder %s28, 2
      %p198 = por %p196, %p197
      %p200 = scmp.ne.s32.totalorder %s185, %s199
      %p201 = scmp.eq.s32.totalorder %s28, 0
      %p202 = por %p200, %p201
      %s204 = sadd.s32 %s203, 1
      %p207 = scmp.eq.s32.totalorder %s22, 2
      %p208 = scmp.ne.s32.totalorder %s203, %s205
      %p209 = scmp.eq.s32.totalorder %s22, 0
      %p210 = por %p208, %p209
      %p211 = scmp.ne.s32.totalorder %s203, %s205
      %p212 = scmp.eq.s32.totalorder %s27, 2
      %p213 = por %p211, %p212
      %p214 = scmp.ne.s32.totalorder %s205, %s206
      %p215 = scmp.eq.s32.totalorder %s27, 0
      %p216 = por %p214, %p215
      %p217 = scmp.ne.s32.totalorder %s205, %s206
      %p218 = scmp.eq.s32.totalorder %s28, 2
      %p219 = por %p217, %p218
      %p221 = scmp.ne.s32.totalorder %s206, %s220
      %p222 = scmp.eq.s32.totalorder %s28, 0
      %p223 = por %p221, %p222
      %s224 = ssub.s32 %s22, %s29
      %p225 = scmp.eq.s32.totalorder %s224, 0
      %s227 = sadd.s32 %s226, 1
      %s228 = scalar_select %p225, %s226, %s227
      %p231 = pneg %p225
      %p232 = scmp.eq.s32.totalorder %s22, 2
      %p233 = por %p231, %p232
      %p234 = scmp.ne.s32.totalorder %s226, %s229
      %p235 = scmp.eq.s32.totalorder %s22, 0
      %p236 = por %p234, %p235
      %p237 = scmp.ne.s32.totalorder %s226, %s229
      %p238 = scmp.eq.s32.totalorder %s27, 2
      %p239 = por %p237, %p238
      %p240 = scmp.ne.s32.totalorder %s229, %s230
      %p241 = scmp.eq.s32.totalorder %s27, 0
      %p242 = por %p240, %p241
      %p243 = scmp.ne.s32.totalorder %s229, %s230
      %p244 = scmp.eq.s32.totalorder %s28, 2
      %p245 = por %p243, %p244
      %p247 = scmp.ne.s32.totalorder %s230, %s246
      %p248 = scmp.eq.s32.totalorder %s28, 0
      %p249 = por %p247, %p248
      %p250 = scmp.le.s32.totalorder 1, %s22
      %p251 = scmp.lt.s32.totalorder %s22, 4
      %p252 = pnand %p250, %p251
      %p253 = pneg %p252
      // Predicated region
      $region9: #{tpu_custom_call.1} parent=5 // pred_check
        _
      $region10: #{tpu_custom_call.1} parent=5 // pred_check_branch
        %255 = sbr.rel (%p252) target = $region12
      $region11: #{tpu_custom_call.1} parent=5 // pred_region
        %s256 = ssub.s32 %s22, 1
        // Predicated region
        $region13: #{tpu_custom_call.1} parent=11 // pred_check
          %p257 = pneg %p69
        $region14: #{tpu_custom_call.1} parent=11 // pred_check_branch
          %259 = sbr.rel (%p257) target = $region16
        $region15: #{tpu_custom_call.1} parent=11 // pred_region
          %s261 = ssub.s32 1280, 1280
          %262 = vsyncadd [#allocation4], %s261
          %s263 = sshll.u32 [#allocation3], 4
          %s264 = int_to_ptr.vmem [resolvable:$true] %s263
          %269 = dma.hbm_to_vmem [thread:$0]  %s1, 1280, %s264, [#allocation4], 128, 128, 8
        $region16: #{tpu_custom_call.1} parent=11 // pred_fallthru
          _
        // Predicated region
        $region17: #{tpu_custom_call.1} parent=11 // pred_check
          %p270 = pneg %p90
        $region18: #{tpu_custom_call.1} parent=11 // pred_check_branch
          %272 = sbr.rel (%p270) target = $region20
        $region19: #{tpu_custom_call.1} parent=11 // pred_region
          _
        $region20: #{tpu_custom_call.1} parent=11 // pred_fallthru
          _
        // Predicated region
        $region21: #{tpu_custom_call.1} parent=11 // pred_check
          %p273 = pneg %p111
        $region22: #{tpu_custom_call.1} parent=11 // pred_check_branch
          %275 = sbr.rel (%p273) target = $region24
        $region23: #{tpu_custom_call.1} parent=11 // pred_region
          %s277 = ssub.s32 2048, 2048
          %278 = vsyncadd [#allocation7], %s277
          %s279 = sshll.u32 [#allocation6], 4
          %s280 = int_to_ptr.vmem [resolvable:$true] %s279
          %285 = dma.hbm_to_vmem [thread:$0]  %s3, 2048, %s280, [#allocation7], 64, 64, 4
        $region24: #{tpu_custom_call.1} parent=11 // pred_fallthru
          _
        // Predicated region
        $region25: #{tpu_custom_call.1} parent=11 // pred_check
          %p286 = pneg %p132
        $region26: #{tpu_custom_call.1} parent=11 // pred_check_branch
          %288 = sbr.rel (%p286) target = $region28
        $region27: #{tpu_custom_call.1} parent=11 // pred_region
          _
        $region28: #{tpu_custom_call.1} parent=11 // pred_fallthru
          _
        // Predicated region
        $region29: #{tpu_custom_call.1} parent=11 // pred_check
          %p289 = pneg %p153
        $region30: #{tpu_custom_call.1} parent=11 // pred_check_branch
          %291 = sbr.rel (%p289) target = $region32
        $region31: #{tpu_custom_call.1} parent=11 // pred_region
          _
        $region32: #{tpu_custom_call.1} parent=11 // pred_fallthru
          _
        // Predicated region
        $region33: #{tpu_custom_call.1} parent=11 // pred_check
          %p292 = pneg %p174
        $region34: #{tpu_custom_call.1} parent=11 // pred_check_branch
          %294 = sbr.rel (%p292) target = $region36
        $region35: #{tpu_custom_call.1} parent=11 // pred_region
          _
        $region36: #{tpu_custom_call.1} parent=11 // pred_fallthru
          _
        // Predicated region
        $region37: #{tpu_custom_call.1} parent=11 // pred_check
          %p295 = pneg %p195
        $region38: #{tpu_custom_call.1} parent=11 // pred_check_branch
          %297 = sbr.rel (%p295) target = $region40
        $region39: #{tpu_custom_call.1} parent=11 // pred_region
          _
        $region40: #{tpu_custom_call.1} parent=11 // pred_fallthru
          _
        // Predicated region
        $region41: #{tpu_custom_call.1} parent=11 // pred_check
          %p298 = pneg %p216
        $region42: #{tpu_custom_call.1} parent=11 // pred_check_branch
          %300 = sbr.rel (%p298) target = $region44
        $region43: #{tpu_custom_call.1} parent=11 // pred_region
          _
        $region44: #{tpu_custom_call.1} parent=11 // pred_fallthru
          _
      $region12: #{tpu_custom_call.1} parent=5 // pred_fallthru
        _
      %p301 = scmp.lt.s32.totalorder %s22, 3
      // Predicated region
      $region45: #{tpu_custom_call.1} parent=5 // pred_check
        %p302 = pneg %p301
      $region46: #{tpu_custom_call.1} parent=5 // pred_check_branch
        %304 = sbr.rel (%p302) target = $region48
      $region47: #{tpu_custom_call.1} parent=5 // pred_region
        // Predicated region
        $region49: #{tpu_custom_call.1} parent=47 // pred_check
          %p305 = pneg %p42
        $region50: #{tpu_custom_call.1} parent=47 // pred_check_branch
          %307 = sbr.rel (%p305) target = $region52
        $region51: #{tpu_custom_call.1} parent=47 // pred_region
          %s308 = smul.u32 2, %s22
          %s309 = ssub.s32 5, %s308
          %p310 = scmp.lt.s32.totalorder %s309, 2
          %s311 = scalar_select %p310, %s309, 2
          %s312 = smul.u32 128, %s311
          %p313 = scmp.lt.s32.totalorder %s308, 4
          %s314 = scalar_select %p313, %s308, 4
          %s315 = smul.addr %s314, 8
          %s316 = scalar_lea.vmem %s0, %s315
          %s317 = smul.u32 2, %s22
          %s318 = ssub.s32 5, %s317
          %p319 = scmp.lt.s32.totalorder %s318, 2
          %s320 = scalar_select %p319, %s318, 2
          %s321 = smul.u32 128, %s320
        $region52: #{tpu_custom_call.1} parent=47 // pred_fallthru
          _
      $region48: #{tpu_custom_call.1} parent=5 // pred_fallthru
        _
      %p322 = scmp.le.s32.totalorder 1, %s22
      %p323 = scmp.lt.s32.totalorder %s22, 4
      %p324 = pnand %p322, %p323
      %p325 = pneg %p324
      // Predicated region
      $region53: #{tpu_custom_call.1} parent=5 // pred_check
        _
      $region54: #{tpu_custom_call.1} parent=5 // pred_check_branch
        %327 = sbr.rel (%p324) target = $region56
      $region55: #{tpu_custom_call.1} parent=5 // pred_region
        %s328 = ssub.s32 %s22, 1
        // Predicated region
        $region57: #{tpu_custom_call.1} parent=55 // pred_check
          %p329 = pneg %p69
        $region58: #{tpu_custom_call.1} parent=55 // pred_check_branch
          %331 = sbr.rel (%p329) target = $region60
        $region59: #{tpu_custom_call.1} parent=55 // pred_region
          %332 = dma.done [#allocation4], 1280
        $region60: #{tpu_custom_call.1} parent=55 // pred_fallthru
          _
        // Predicated region
        $region61: #{tpu_custom_call.1} parent=55 // pred_check
          %p333 = pneg %p111
        $region62: #{tpu_custom_call.1} parent=55 // pred_check_branch
          %335 = sbr.rel (%p333) target = $region64
        $region63: #{tpu_custom_call.1} parent=55 // pred_region
          %336 = dma.done [#allocation7], 2048
        $region64: #{tpu_custom_call.1} parent=55 // pred_fallthru
          _
        %s337 = smul.u32 2, %s27
        %s338 = ssub.s32 5, %s337
        %p339 = scmp.lt.s32.totalorder %s338, 2
        %s340 = scalar_select %p339, %s338, 2
        %s341 = smul.u32 128, %s340
        %p342 = scmp.lt.s32.totalorder %s337, 4
        %s343 = scalar_select %p342, %s337, 4
        %s344 = smul.addr %s343, 8
        %s345 = scalar_lea.vmem %s0, %s344
        %p346 = pneg %p48
        %p347 = pneg %p45
        %p348 = pneg %p69
        %p349 = pneg %p66
        %p350 = pneg %p90
        %p351 = pneg %p87
        %p352 = pneg %p111
        %p353 = pneg %p108
        %p354 = pneg %p132
        %p355 = pneg %p129
        %p356 = pneg %p153
        %p357 = pneg %p150
        %p358 = pneg %p174
        %p359 = pneg %p171
        %p360 = pneg %p195
        %p361 = pneg %p192
        %p362 = pneg %p216
        %p363 = pneg %p213
        %p364 = pneg %p242
        %p365 = pneg %p239
        %s366 = sand.u32 %s229, 1
        %s367 = scalar_lea.sflag [#allocation5], %s366
        %s368 = sand.u32 %s229, 1
        %s369 = scalar_lea.vmem [#allocation8], %s368
        %s370 = smul.u32 2, %s27
        %s371 = ssub.s32 5, %s370
        %p372 = scmp.lt.s32.totalorder %s371, 2
        %s373 = scalar_select %p372, %s371, 2
        %s374 = smul.u32 128, %s373
        %p375 = scmp.lt.s32.totalorder %s370, 4
        %s376 = scalar_select %p375, %s370, 4
        %s377 = smul.addr %s376, 8
        %s378 = scalar_lea.vmem %s0, %s377
        %s379 = smul.u32 2, %s27
        %s380 = ssub.s32 5, %s379
        %p381 = scmp.lt.s32.totalorder %s380, 2
        %s382 = scalar_select %p381, %s380, 2
        %s383 = smul.u32 128, %s382
        %v385 = vld [vmem:[%s378] sm:$0xff]
        %v386 = vld [vmem:[%s378 + $0x8] sm:$0xff]
        %v387 = vpack.c.bf16 %v386, %v385
        %v388 = vld [vmem:[#allocation3] sm:$0xff]
        %v389 = vld [vmem:[#allocation3 + $0x8] sm:$0xff]
        %v390 = vld [vmem:[#allocation3 + $0x10] sm:$0xff]
        %v391 = vld [vmem:[#allocation3 + $0x18] sm:$0xff]
        %v392 = vld [vmem:[#allocation3 + $0x20] sm:$0xff]
        %v393 = vld [vmem:[#allocation3 + $0x28] sm:$0xff]
        %v394 = vld [vmem:[#allocation3 + $0x30] sm:$0xff]
        %v395 = vld [vmem:[#allocation3 + $0x38] sm:$0xff]
        %v396 = vld [vmem:[#allocation3 + $0x40] sm:$0xff]
        %v397 = vld [vmem:[#allocation3 + $0x48] sm:$0xff]
        %v398 = vld [vmem:[%s2] sm:$0x3]
        %v400 = vlaneseq
        %v401 = vshrl.u32 %v400, 7
        %v402 = vsub.s32 0, %v401
        %v403 = vrot.slane %v398, %v402
        %v404 = vlaneseq
        %v405 = vshrl.u32 %v404, 7
        %v406 = vsub.s32 1, %v405
        %v407 = vrot.slane %v398, %v406
        %v420 = vunpack.c.l.b16 %v388
        %v421 = vunpack.c.h.b16 %v388
        %v422 = vunpack.c.l.b16 %v389
        %v423 = vunpack.c.h.b16 %v389
        %v424 = vunpack.c.l.b16 %v390
        %v425 = vunpack.c.h.b16 %v390
        %v426 = vunpack.c.l.b16 %v391
        %v427 = vunpack.c.h.b16 %v391
        %v428 = vunpack.c.l.b16 %v392
        %v429 = vunpack.c.h.b16 %v392
        %v430 = vunpack.c.l.b16 %v393
        %v431 = vunpack.c.h.b16 %v393
        %v432 = vunpack.c.l.b16 %v394
        %v433 = vunpack.c.h.b16 %v394
        %v434 = vunpack.c.l.b16 %v395
        %v435 = vunpack.c.h.b16 %v395
        %v436 = vunpack.c.l.b16 %v396
        %v437 = vunpack.c.h.b16 %v396
        %v438 = vunpack.c.l.b16 %v397
        %v439 = vunpack.c.h.b16 %v397
        %v440 = vpack.c.b16 %v422, %v420
        %v441 = vpack.c.b16 %v423, %v421
        %v442 = vpack.c.b16 %v426, %v424
        %v443 = vpack.c.b16 %v427, %v425
        %v444 = vpack.c.b16 %v430, %v428
        %v445 = vpack.c.b16 %v431, %v429
        %v446 = vpack.c.b16 %v434, %v432
        %v447 = vpack.c.b16 %v435, %v433
        %v448 = vpack.c.b16 %v438, %v436
        %v449 = vpack.c.b16 %v439, %v437
        %vm460 = vcmask 654336
        %v462 = vsel %vm460, %v387, 0
        %464 = vmatprep.subr.bf16.mxu0 0
        %465 = vmatpush1.bf16.msra.mxu0 0
        %466 = vmatprep.subr.bf16.mxu0 0
        %467 = vmatpush1.bf16.msra.mxu0 0
        %468 = vmatprep.subr.bf16.mxu0 0
        %469 = vmatpush1.bf16.msra.mxu0 0
        %470 = vmatprep.subr.bf16.mxu0 %v449
        %471 = vmatpush1.bf16.msra.mxu0 %v448
        %472 = vmatprep.subr.bf16.mxu0 %v447
        %473 = vmatpush1.bf16.msra.mxu0 %v446
        %474 = vmatprep.subr.bf16.mxu0 %v445
        %475 = vmatpush1.bf16.msra.mxu0 %v444
        %476 = vmatprep.subr.bf16.mxu0 %v443
        %477 = vmatpush1.bf16.msra.mxu0 %v442
        %478 = vmatprep.subr.bf16.mxu0 %v441
        %479 = vmatpush1.bf16.msra.mxu0 %v440
        %480 = vmatprep.subr.bf16.mxu0 0
        %481 = vmatpush2.bf16.msra.mxu0 0
        %482 = vmatprep.subr.bf16.mxu0 0
        %483 = vmatpush2.bf16.msra.mxu0 0
        %484 = vmatprep.subr.bf16.mxu0 0
        %485 = vmatpush2.bf16.msra.mxu0 0
        %486 = vmatprep.subr.bf16.mxu0 0
        %487 = vmatpush2.bf16.msra.mxu0 0
        %488 = vmatprep.subr.bf16.mxu0 0
        %489 = vmatpush2.bf16.msra.mxu0 0
        %490 = vmatprep.subr.bf16.mxu0 0
        %491 = vmatpush2.bf16.msra.mxu0 0
        %492 = vmatprep.subr.bf16.mxu0 0
        %493 = vmatpush2.bf16.msra.mxu0 0
        %494 = vmatprep.subr.bf16.mxu0 0
        %495 = vmatpush2.bf16.msra.mxu0 0
        %496 = vmatprep.mubr.bf16.mxu0 0
        %497 = vmatmul.mubr.bf16.gmra.mxu0 %v462
        %v498 = vpop.f32.mrf.mxu0
        %v499 = vadd.f32 %v403, %v498
        %v500 = vpop.f32.mrf.mxu0
        %v501 = vadd.f32 %v407, %v500
        %v502 = vpop.f32.mrf.mxu0
        %v503 = vadd.f32 %v403, %v502
        %v504 = vpop.f32.mrf.mxu0
        %v505 = vadd.f32 %v407, %v504
        %506 = vdwg.mxu0
        %v507 = vmax.f32 %v499, 0.0
        %v508 = vmax.f32 %v501, 0.0
        %v509 = vmax.f32 %v503, 0.0
        %v510 = vmax.f32 %v505, 0.0
        %v511 = vpack.c.bf16 %v509, %v507
        %v512 = vpack.c.bf16 %v510, %v508
        %v513 = vld [vmem:[#allocation6] sm:$0xf]
        %v514 = vld [vmem:[#allocation6 + $0x4] sm:$0xf]
        %v515 = vld [vmem:[#allocation6 + $0x8] sm:$0xf]
        %v516 = vld [vmem:[#allocation6 + $0xc] sm:$0xf]
        %v517 = vld [vmem:[#allocation6 + $0x10] sm:$0xf]
        %v518 = vld [vmem:[#allocation6 + $0x14] sm:$0xf]
        %v519 = vld [vmem:[#allocation6 + $0x18] sm:$0xf]
        %v520 = vld [vmem:[#allocation6 + $0x1c] sm:$0xf]
        %v521 = vld [vmem:[#allocation6 + $0x20] sm:$0xf]
        %v522 = vld [vmem:[#allocation6 + $0x24] sm:$0xf]
        %v523 = vld [vmem:[#allocation6 + $0x28] sm:$0xf]
        %v524 = vld [vmem:[#allocation6 + $0x2c] sm:$0xf]
        %v525 = vld [vmem:[#allocation6 + $0x30] sm:$0xf]
        %v526 = vld [vmem:[#allocation6 + $0x34] sm:$0xf]
        %v527 = vld [vmem:[#allocation6 + $0x38] sm:$0xf]
        %v528 = vld [vmem:[#allocation6 + $0x3c] sm:$0xf]
        %v529 = vld [vmem:[#allocation6 + $0x40] sm:$0xf]
        %v530 = vld [vmem:[#allocation6 + $0x44] sm:$0xf]
        %v531 = vld [vmem:[#allocation6 + $0x48] sm:$0xf]
        %v532 = vld [vmem:[#allocation6 + $0x4c] sm:$0xf]
        %v533 = vld [vmem:[#allocation6 + $0x50] sm:$0xf]
        %v534 = vld [vmem:[#allocation6 + $0x54] sm:$0xf]
        %v535 = vld [vmem:[#allocation6 + $0x58] sm:$0xf]
        %v536 = vld [vmem:[#allocation6 + $0x5c] sm:$0xf]
        %v537 = vld [vmem:[#allocation6 + $0x60] sm:$0xf]
        %v538 = vld [vmem:[#allocation6 + $0x64] sm:$0xf]
        %v539 = vld [vmem:[#allocation6 + $0x68] sm:$0xf]
        %v540 = vld [vmem:[#allocation6 + $0x6c] sm:$0xf]
        %v541 = vld [vmem:[#allocation6 + $0x70] sm:$0xf]
        %v542 = vld [vmem:[#allocation6 + $0x74] sm:$0xf]
        %v543 = vld [vmem:[#allocation6 + $0x78] sm:$0xf]
        %v544 = vld [vmem:[#allocation6 + $0x7c] sm:$0xf]
        %v545 = vld [vmem:[%s4] sm:$0x1]
        %v547 = vlaneseq
        %v548 = vshrl.u32 %v547, 7
        %v549 = vsub.s32 0, %v548
        %v550 = vrot.slane %v545, %v549
        %v584 = vunpack.c.l.b16 %v513
        %v585 = vunpack.c.l.b16 %v514
        %v586 = vunpack.c.l.b16 %v515
        %v587 = vunpack.c.l.b16 %v516
        %v588 = vunpack.c.l.b16 %v517
        %v589 = vunpack.c.l.b16 %v518
        %v590 = vunpack.c.l.b16 %v519
        %v591 = vunpack.c.l.b16 %v520
        %v592 = vunpack.c.l.b16 %v521
        %v593 = vunpack.c.l.b16 %v522
        %v594 = vunpack.c.l.b16 %v523
        %v595 = vunpack.c.l.b16 %v524
        %v596 = vunpack.c.l.b16 %v525
        %v597 = vunpack.c.l.b16 %v526
        %v598 = vunpack.c.l.b16 %v527
        %v599 = vunpack.c.l.b16 %v528
        %v600 = vunpack.c.l.b16 %v529
        %v601 = vunpack.c.l.b16 %v530
        %v602 = vunpack.c.l.b16 %v531
        %v603 = vunpack.c.l.b16 %v532
        %v604 = vunpack.c.l.b16 %v533
        %v605 = vunpack.c.l.b16 %v534
        %v606 = vunpack.c.l.b16 %v535
        %v607 = vunpack.c.l.b16 %v536
        %v608 = vunpack.c.l.b16 %v537
        %v609 = vunpack.c.l.b16 %v538
        %v610 = vunpack.c.l.b16 %v539
        %v611 = vunpack.c.l.b16 %v540
        %v612 = vunpack.c.l.b16 %v541
        %v613 = vunpack.c.l.b16 %v542
        %v614 = vunpack.c.l.b16 %v543
        %v615 = vunpack.c.l.b16 %v544
        %v616 = vpack.c.b16 %v585, %v584
        %v617 = vpack.c.b16 %v587, %v586
        %v618 = vpack.c.b16 %v589, %v588
        %v619 = vpack.c.b16 %v591, %v590
        %v620 = vpack.c.b16 %v593, %v592
        %v621 = vpack.c.b16 %v595, %v594
        %v622 = vpack.c.b16 %v597, %v596
        %v623 = vpack.c.b16 %v599, %v598
        %v624 = vpack.c.b16 %v601, %v600
        %v625 = vpack.c.b16 %v603, %v602
        %v626 = vpack.c.b16 %v605, %v604
        %v627 = vpack.c.b16 %v607, %v606
        %v628 = vpack.c.b16 %v609, %v608
        %v629 = vpack.c.b16 %v611, %v610
        %v630 = vpack.c.b16 %v613, %v612
        %v631 = vpack.c.b16 %v615, %v614
        %648 = vmatprep.subr.bf16.mxu0 0
        %649 = vmatpush1.bf16.msra.mxu0 %v623
        %650 = vmatprep.subr.bf16.mxu0 0
        %651 = vmatpush1.bf16.msra.mxu0 %v622
        %652 = vmatprep.subr.bf16.mxu0 0
        %653 = vmatpush1.bf16.msra.mxu0 %v621
        %654 = vmatprep.subr.bf16.mxu0 0
        %655 = vmatpush1.bf16.msra.mxu0 %v620
        %656 = vmatprep.subr.bf16.mxu0 0
        %657 = vmatpush1.bf16.msra.mxu0 %v619
        %658 = vmatprep.subr.bf16.mxu0 0
        %659 = vmatpush1.bf16.msra.mxu0 %v618
        %660 = vmatprep.subr.bf16.mxu0 0
        %661 = vmatpush1.bf16.msra.mxu0 %v617
        %662 = vmatprep.subr.bf16.mxu0 0
        %663 = vmatpush1.bf16.msra.mxu0 %v616
        %664 = vmatprep.subr.bf16.mxu0 0
        %665 = vmatpush2.bf16.msra.mxu0 %v631
        %666 = vmatprep.subr.bf16.mxu0 0
        %667 = vmatpush2.bf16.msra.mxu0 %v630
        %668 = vmatprep.subr.bf16.mxu0 0
        %669 = vmatpush2.bf16.msra.mxu0 %v629
        %670 = vmatprep.subr.bf16.mxu0 0
        %671 = vmatpush2.bf16.msra.mxu0 %v628
        %672 = vmatprep.subr.bf16.mxu0 0
        %673 = vmatpush2.bf16.msra.mxu0 %v627
        %674 = vmatprep.subr.bf16.mxu0 0
        %675 = vmatpush2.bf16.msra.mxu0 %v626
        %676 = vmatprep.subr.bf16.mxu0 0
        %677 = vmatpush2.bf16.msra.mxu0 %v625
        %678 = vmatprep.subr.bf16.mxu0 0
        %679 = vmatpush2.bf16.msra.mxu0 %v624
        %680 = vmatprep.mubr.bf16.mxu0 %v512
        %681 = vmatmul.mubr.bf16.gmra.mxu0 %v511
        %v682 = vpop.f32.mrf.mxu0
        %v683 = vadd.f32 %v550, %v682
        %v684 = vpop.f32.mrf.mxu0
        %v685 = vpop.f32.mrf.mxu0
        %v686 = vadd.f32 %v550, %v685
        %v687 = vpop.f32.mrf.mxu0
        %688 = vdwg.mxu0
        %v689 = vmax.f32 %v683, 0.0
        %v690 = vmax.f32 %v686, 0.0
        %v691 = vpack.c.bf16 %v690, %v689
        %v692 = vld [vmem:[%s5] sm:$0xf]
        %v693 = vld [vmem:[%s5 + $0x4] sm:$0xf]
        %v694 = vld [vmem:[%s5 + $0x8] sm:$0xf]
        %v695 = vld [vmem:[%s5 + $0xc] sm:$0xf]
        %v696 = vld [vmem:[%s5 + $0x10] sm:$0xf]
        %v697 = vld [vmem:[%s5 + $0x14] sm:$0xf]
        %v698 = vld [vmem:[%s5 + $0x18] sm:$0xf]
        %v699 = vld [vmem:[%s5 + $0x1c] sm:$0xf]
        %v700 = vld [vmem:[%s5 + $0x20] sm:$0xf]
        %v701 = vld [vmem:[%s5 + $0x24] sm:$0xf]
        %v702 = vld [vmem:[%s5 + $0x28] sm:$0xf]
        %v703 = vld [vmem:[%s5 + $0x2c] sm:$0xf]
        %v704 = vld [vmem:[%s5 + $0x30] sm:$0xf]
        %v705 = vld [vmem:[%s5 + $0x34] sm:$0xf]
        %v706 = vld [vmem:[%s5 + $0x38] sm:$0xf]
        %v707 = vld [vmem:[%s5 + $0x3c] sm:$0xf]
        %v708 = vld [vmem:[%s6] sm:$0x1]
        %v710 = vlaneseq
        %v711 = vshrl.u32 %v710, 7
        %v712 = vsub.s32 0, %v711
        %v713 = vrot.slane %v708, %v712
        %v731 = vunpack.c.l.b16 %v692
        %v732 = vunpack.c.l.b16 %v693
        %v733 = vunpack.c.l.b16 %v694
        %v734 = vunpack.c.l.b16 %v695
        %v735 = vunpack.c.l.b16 %v696
        %v736 = vunpack.c.l.b16 %v697
        %v737 = vunpack.c.l.b16 %v698
        %v738 = vunpack.c.l.b16 %v699
        %v739 = vunpack.c.l.b16 %v700
        %v740 = vunpack.c.l.b16 %v701
        %v741 = vunpack.c.l.b16 %v702
        %v742 = vunpack.c.l.b16 %v703
        %v743 = vunpack.c.l.b16 %v704
        %v744 = vunpack.c.l.b16 %v705
        %v745 = vunpack.c.l.b16 %v706
        %v746 = vunpack.c.l.b16 %v707
        %v747 = vpack.c.b16 %v732, %v731
        %v748 = vpack.c.b16 %v734, %v733
        %v749 = vpack.c.b16 %v736, %v735
        %v750 = vpack.c.b16 %v738, %v737
        %v751 = vpack.c.b16 %v740, %v739
        %v752 = vpack.c.b16 %v742, %v741
        %v753 = vpack.c.b16 %v744, %v743
        %v754 = vpack.c.b16 %v746, %v745
        %763 = vmatprep.subr.bf16.mxu0 0
        %764 = vmatpush1.bf16.msra.mxu0 %v754
        %765 = vmatprep.subr.bf16.mxu0 0
        %766 = vmatpush1.bf16.msra.mxu0 %v753
        %767 = vmatprep.subr.bf16.mxu0 0
        %768 = vmatpush1.bf16.msra.mxu0 %v752
        %769 = vmatprep.subr.bf16.mxu0 0
        %770 = vmatpush1.bf16.msra.mxu0 %v751
        %771 = vmatprep.subr.bf16.mxu0 0
        %772 = vmatpush1.bf16.msra.mxu0 %v750
        %773 = vmatprep.subr.bf16.mxu0 0
        %774 = vmatpush1.bf16.msra.mxu0 %v749
        %775 = vmatprep.subr.bf16.mxu0 0
        %776 = vmatpush1.bf16.msra.mxu0 %v748
        %777 = vmatprep.subr.bf16.mxu0 0
        %778 = vmatpush1.bf16.msra.mxu0 %v747
        %779 = vmatprep.subr.bf16.mxu0 0
        %780 = vmatpush2.bf16.msra.mxu0 0
        %781 = vmatprep.subr.bf16.mxu0 0
        %782 = vmatpush2.bf16.msra.mxu0 0
        %783 = vmatprep.subr.bf16.mxu0 0
        %784 = vmatpush2.bf16.msra.mxu0 0
        %785 = vmatprep.subr.bf16.mxu0 0
        %786 = vmatpush2.bf16.msra.mxu0 0
        %787 = vmatprep.subr.bf16.mxu0 0
        %788 = vmatpush2.bf16.msra.mxu0 0
        %789 = vmatprep.subr.bf16.mxu0 0
        %790 = vmatpush2.bf16.msra.mxu0 0
        %791 = vmatprep.subr.bf16.mxu0 0
        %792 = vmatpush2.bf16.msra.mxu0 0
        %793 = vmatprep.subr.bf16.mxu0 0
        %794 = vmatpush2.bf16.msra.mxu0 0
        %795 = vmatprep.mubr.bf16.mxu0 0
        %796 = vmatmul.mubr.bf16.gmra.mxu0 %v691
        %v797 = vpop.f32.mrf.mxu0
        %v798 = vadd.f32 %v713, %v797
        %v799 = vpop.f32.mrf.mxu0
        %v800 = vpop.f32.mrf.mxu0
        %v801 = vadd.f32 %v713, %v800
        %v802 = vpop.f32.mrf.mxu0
        %803 = vdwg.mxu0
        %v804 = vmax.f32 %v798, 0.0
        %v805 = vmax.f32 %v801, 0.0
        %v806 = vld [vmem:[%s7] sm:$0x1]
        %v807 = vld [vmem:[#allocation2] sm:$0x1]
        %809 = vset.pattern.permute.xlu0 0
        %810 = vperm.xlu0 %809, %v807
        %v811 = vpop.permute.xlu0 %810
        %v813 = vlaneseq
        %v814 = vshrl.u32 %v813, 7
        %v815 = vsub.s32 0, %v814
        %v816 = vrot.slane %v811, %v815
        %vm817 = vcmask 130048
        %v819 = vsel %vm817, %v806, 0
        %v822 = vsel %vm817, %v804, 0
        %v825 = vsel %vm817, %v805, 0
        %827 = vmatprep.subr.mxu0 0.0
        %828 = vmatpush1.xpose.msra.mxu0 0.0
        %829 = vmatprep.subr.mxu0 0.0
        %830 = vmatpush1.xpose.msra.mxu0 0.0
        %831 = vmatprep.subr.mxu0 0.0
        %832 = vmatpush1.xpose.msra.mxu0 0.0
        %833 = vmatprep.subr.mxu0 0.0
        %834 = vmatpush1.xpose.msra.mxu0 0.0
        %835 = vmatprep.subr.mxu0 0.0
        %836 = vmatpush1.xpose.msra.mxu0 0.0
        %837 = vmatprep.subr.mxu0 0.0
        %838 = vmatpush1.xpose.msra.mxu0 0.0
        %839 = vmatprep.subr.mxu0 0.0
        %840 = vmatpush1.xpose.msra.mxu0 0.0
        %841 = vmatprep.subr.mxu0 0.0
        %842 = vmatpush1.xpose.msra.mxu0 0.0
        %843 = vmatprep.subr.mxu0 0.0
        %844 = vmatpush1.xpose.msra.mxu0 0.0
        %845 = vmatprep.subr.mxu0 0.0
        %846 = vmatpush1.xpose.msra.mxu0 0.0
        %847 = vmatprep.subr.mxu0 0.0
        %848 = vmatpush1.xpose.msra.mxu0 0.0
        %849 = vmatprep.subr.mxu0 0.0
        %850 = vmatpush1.xpose.msra.mxu0 0.0
        %851 = vmatprep.subr.mxu0 0.0
        %852 = vmatpush1.xpose.msra.mxu0 0.0
        %853 = vmatprep.subr.mxu0 0.0
        %854 = vmatpush1.xpose.msra.mxu0 0.0
        %855 = vmatprep.subr.mxu0 0.0
        %856 = vmatpush1.xpose.msra.mxu0 %v825
        %857 = vmatprep.subr.mxu0 0.0
        %858 = vmatpush1.xpose.msra.mxu0 %v822
        %859 = vmatprep.subr.mxu0 0.0
        %860 = vmatpush2.xpose.msra.mxu0 0.0
        %861 = vmatprep.subr.mxu0 0.0
        %862 = vmatpush2.xpose.msra.mxu0 0.0
        %863 = vmatprep.subr.mxu0 0.0
        %864 = vmatpush2.xpose.msra.mxu0 0.0
        %865 = vmatprep.subr.mxu0 0.0
        %866 = vmatpush2.xpose.msra.mxu0 0.0
        %867 = vmatprep.subr.mxu0 0.0
        %868 = vmatpush2.xpose.msra.mxu0 0.0
        %869 = vmatprep.subr.mxu0 0.0
        %870 = vmatpush2.xpose.msra.mxu0 0.0
        %871 = vmatprep.subr.mxu0 0.0
        %872 = vmatpush2.xpose.msra.mxu0 0.0
        %873 = vmatprep.subr.mxu0 0.0
        %874 = vmatpush2.xpose.msra.mxu0 0.0
        %875 = vmatprep.subr.mxu0 0.0
        %876 = vmatpush2.xpose.msra.mxu0 0.0
        %877 = vmatprep.subr.mxu0 0.0
        %878 = vmatpush2.xpose.msra.mxu0 0.0
        %879 = vmatprep.subr.mxu0 0.0
        %880 = vmatpush2.xpose.msra.mxu0 0.0
        %881 = vmatprep.subr.mxu0 0.0
        %882 = vmatpush2.xpose.msra.mxu0 0.0
        %883 = vmatprep.subr.mxu0 0.0
        %884 = vmatpush2.xpose.msra.mxu0 0.0
        %885 = vmatprep.subr.mxu0 0.0
        %886 = vmatpush2.xpose.msra.mxu0 0.0
        %887 = vmatprep.subr.mxu0 0.0
        %888 = vmatpush2.xpose.msra.mxu0 0.0
        %889 = vmatprep.subr.mxu0 0.0
        %890 = vmatpush2.xpose.msra.mxu0 0.0
        %891 = vmatprep.mubr.f32.mxu0 0.0
        %892 = vmatmul.mubr.f32.gmra.mxu0 %v819
        %v893 = vpop.f32.mrf.mxu0
        %v894 = vadd.f32 %v816, %v893
        %v895 = vpop.f32.mrf.mxu0
        %896 = vdwg.mxu0
        %v897 = vsub.f32 %v894, %v894
        %v898 = vmul.f32 %v897, 1.442695
        %v899 = vpow.pop %v898
        %vm900 = vcmask 122880
        %901 = vst.msk [vmem:[%s369] sm:$0x1] %vm900, %v899
        %s902 = sand.u32 %s229, 1
        %s903 = scalar_lea.sflag [#allocation5], %s902
        %s904 = sand.u32 %s229, 1
        %s905 = scalar_lea.vmem [#allocation8], %s904
        // Predicated region
        $region65: #{tpu_custom_call.1} parent=55 // pred_check
          %p906 = pneg %p239
        $region66: #{tpu_custom_call.1} parent=55 // pred_check_branch
          %908 = sbr.rel (%p906) target = $region68
        $region67: #{tpu_custom_call.1} parent=55 // pred_region
          %s910 = ssub.s32 16, 16
          %911 = vsyncadd %s903, %s910
          %s912 = smul.addr %s27, 16
          %s913 = scalar_lea.hbm %s9, %s912
          %s915 = sshll.u32 %s905, 4
          %s916 = int_to_ptr.vmem [resolvable:$true] %s915
          %918 = dma.vmem_to_hbm [thread:$0]  %s916, 16, %s913, %s903
        $region68: #{tpu_custom_call.1} parent=55 // pred_fallthru
          _
      $region56: #{tpu_custom_call.1} parent=5 // pred_fallthru
        _
      %p919 = scmp.le.s32.totalorder 2, %s22
      // Predicated region
      $region69: #{tpu_custom_call.1} parent=5 // pred_check
        %p920 = pneg %p919
      $region70: #{tpu_custom_call.1} parent=5 // pred_check_branch
        %922 = sbr.rel (%p920) target = $region72
      $region71: #{tpu_custom_call.1} parent=5 // pred_region
        %s923 = ssub.s32 %s22, 2
        // Predicated region
        $region73: #{tpu_custom_call.1} parent=71 // pred_check
          %p924 = pneg %p245
        $region74: #{tpu_custom_call.1} parent=71 // pred_check_branch
          %926 = sbr.rel (%p924) target = $region76
        $region75: #{tpu_custom_call.1} parent=71 // pred_region
          %s927 = sand.u32 %s230, 1
          %s928 = scalar_lea.sflag [#allocation5], %s927
          %s929 = sand.u32 %s230, 1
          %s930 = scalar_lea.vmem [#allocation8], %s929
          %931 = dma.done %s928, 16
        $region76: #{tpu_custom_call.1} parent=71 // pred_fallthru
          _
      $region72: #{tpu_custom_call.1} parent=5 // pred_fallthru
        _
    $region6: #{tpu_custom_call.1} parent=1 // loop_footer
      %s26 = sadd.s32 1, %s22
    $region7: #{tpu_custom_call.1} parent=1 // loop_footer_branch
      %21 = sbr.rel target = $region3
    $region8: #{tpu_custom_call.1} parent=1 // loop_exit
      _
    %932 = vsyncpa [#allocation4], 1
    %s933 = scalar_lea.sflag [#allocation4], 1
    %934 = vsyncpa %s933, 1
    %935 = vsyncpa [#allocation7], 1
    %936 = vsyncpa [#allocation5], 1
    %s937 = scalar_lea.sflag [#allocation5], 1
    %938 = vsyncpa %s937, 1

</llo_original>
